<compile_context>
chip_gen: v5e
topology: v5e:2x2
jax: 0.10.0
libtpu: 0.0.40
codegen_flags: <defaults>
</compile_context>

<pallas_src>
import math
import functools

import jax
import jax.numpy as jnp
from jax.experimental import pallas as pl
from jax.experimental.pallas import tpu as pltpu


# ---------------------------------------------------------------------------
# Buffer setup (init-time glue, plain JAX — same math as PyTorch __init__)
# ---------------------------------------------------------------------------
def make_positional_encoding(max_seq_len: int, embed_dim: int) -> jnp.ndarray:
    """Build the `pe` buffer, shape (max_seq_len, 1, embed_dim) like the PyTorch module."""
    position = jnp.arange(max_seq_len, dtype=jnp.float32)[:, None]            # (S, 1)
    div_term = jnp.exp(
        jnp.arange(0, embed_dim, 2, dtype=jnp.float32) * (-math.log(10000.0) / embed_dim)
    )                                                                          # (E/2,)
    pe = jnp.zeros((max_seq_len, embed_dim), dtype=jnp.float32)
    pe = pe.at[:, 0::2].set(jnp.sin(position * div_term))
    pe = pe.at[:, 1::2].set(jnp.cos(position * div_term))
    return pe[:, None, :]                                                      # (S, 1, E)


def _round_up(n: int, m: int) -> int:
    return ((n + m - 1) // m) * m


def _sublane(dtype) -> int:
    # Native sublane tile per dtype width: f32 -> 8, bf16 -> 16, int8/fp8 -> 32.
    return {4: 8, 2: 16, 1: 32}.get(jnp.dtype(dtype).itemsize, 8)


def _chip_config() -> dict:
    """Per-generation block budget / VMEM limit / megacore flag (safe fallback)."""
    try:
        kind = jax.devices()[0].device_kind.lower()
    except Exception:  # pragma: no cover
        kind = ""
    if "v7" in kind:   # 64 MiB physical VMEM, 2 TCs
        return {"block_bytes": 4 << 20, "vmem_limit": 48 << 20, "megacore": True}
    if "v6" in kind:   # 128 MiB physical VMEM, 1 TC
        return {"block_bytes": 8 << 20, "vmem_limit": 64 << 20, "megacore": False}
    if "v5" in kind:   # 128 MiB physical VMEM, 1 TC (scoped default only 16 MiB)
        return {"block_bytes": 8 << 20, "vmem_limit": 64 << 20, "megacore": False}
    # Unknown backend (e.g. interpret mode): conservative defaults.
    return {"block_bytes": 4 << 20, "vmem_limit": 32 << 20, "megacore": False}


# ---------------------------------------------------------------------------
# Pallas kernels (operate on lane-dense 2-D blocks)
# ---------------------------------------------------------------------------
def _pe_add_kernel(x_ref, pe_ref, o_ref, *, batch_tile, embed_dim):
    # x_ref/o_ref: (ts, bt*E); pe_ref: (ts, E).  Chunked add — no materialized tile.
    pe = pe_ref[...]
    for b in range(batch_tile):
        sl = slice(b * embed_dim, (b + 1) * embed_dim)
        o_ref[:, sl] = (x_ref[:, sl] + pe).astype(o_ref.dtype)


def _pe_add_dropout_kernel(x_ref, pe_ref, bits_ref, o_ref, *,
                           batch_tile, embed_dim, keep_prob):
    # Training path: add positional encoding then inverted dropout using a
    # precomputed uint32 random-bits stream (portable: no pltpu.prng_* needed).
    pe = pe_ref[...]
    threshold = jnp.uint32(min(int(keep_prob * (2.0 ** 32)), 2 ** 32 - 1))
    inv_keep = jnp.asarray(1.0 / keep_prob, dtype=o_ref.dtype)
    for b in range(batch_tile):
        sl = slice(b * embed_dim, (b + 1) * embed_dim)
        y = (x_ref[:, sl] + pe) * inv_keep
        keep = bits_ref[:, sl] < threshold
        o_ref[:, sl] = jnp.where(keep, y, jnp.zeros_like(y)).astype(o_ref.dtype)


# ---------------------------------------------------------------------------
# Wrapper
# ---------------------------------------------------------------------------
def positional_encoder(x, pe, *, dropout_p: float = 0.1, training: bool = False,
                       rng_key=None):
    """x: (seq_len, batch, embed_dim); pe: (max_seq_len, 1, embed_dim)."""
    S, B, E = x.shape
    F = B * E
    itemsize = jnp.dtype(x.dtype).itemsize
    sub = _sublane(x.dtype)
    cfg = _chip_config()

    apply_dropout = training and dropout_p > 0.0
    # Per-element VMEM bytes of one block column: x-in + out (+ uint32 dropout bits).
    per_elem = 2 * itemsize + (4 if apply_dropout else 0)

    # ---- batch tile: only shrink if the resulting block stays lane-aligned ----
    bt = B
    while bt > 1 and sub * bt * E * per_elem > cfg["block_bytes"]:
        cand = (bt + 1) // 2
        if (cand * E) % 128 != 0:   # would violate the (8,128) BlockSpec rule
            break
        bt = cand

    # ---- sequence tile: biggest multiple of the sublane tile within budget ----
    row_bytes = bt * E * per_elem
    ts = (cfg["block_bytes"] // max(row_bytes, 1)) // sub * sub
    ts = max(sub, ts)
    ts = min(ts, _round_up(S, sub))

    # v7x only: shard the parallel seq axis evenly across the two TensorCores.
    if cfg["megacore"] and S > sub:
        steps = pl.cdiv(S, ts)
        if steps < 2:
            ts = max(sub, _round_up(pl.cdiv(S, 2), sub))
        elif steps % 2 == 1:
            ts = max(sub, _round_up(pl.cdiv(S, steps + 1), sub))

    grid = (pl.cdiv(S, ts), pl.cdiv(B, bt))

    # Lane-dense views; pe stays compact (S, E) and is cast to the activation dtype.
    x2 = x.reshape(S, F)                                   # (S, B*E)
    pe2 = pe.reshape(pe.shape[0], E).astype(x.dtype)       # (max_seq_len, E)

    x_spec = pl.BlockSpec((ts, bt * E), lambda i, j: (i, j))
    pe_spec = pl.BlockSpec((ts, E), lambda i, j: (i, 0))
    out_spec = pl.BlockSpec((ts, bt * E), lambda i, j: (i, j))
    out_shape = jax.ShapeDtypeStruct((S, F), x.dtype)

    # Double-buffered working set (x + out [+ bits] + pe) must fit the limit.
    block_working_set = 2 * (ts * bt * E * per_elem + ts * E * itemsize)
    vmem_limit = max(cfg["vmem_limit"], _round_up(block_working_set + (1 << 20), 1 << 20))
    cparams = pltpu.CompilerParams(
        dimension_semantics=("parallel", "parallel"),
        vmem_limit_bytes=vmem_limit,
    )

    bytes_io = 2 * S * F * itemsize + S * E * itemsize   # read x + write y + read pe[:S]

    if not apply_dropout:
        kernel = functools.partial(_pe_add_kernel, batch_tile=bt, embed_dim=E)
        cost = pl.CostEstimate(flops=S * F, transcendentals=0, bytes_accessed=bytes_io)
        y2 = pl.pallas_call(
            kernel,
            out_shape=out_shape,
            grid_spec=pltpu.PrefetchScalarGridSpec(
                num_scalar_prefetch=0, grid=grid,
                in_specs=[x_spec, pe_spec], out_specs=out_spec),
            compiler_params=cparams,
            cost_estimate=cost,
        )(x2, pe2)
        return y2.reshape(S, B, E)

    keep_prob = 1.0 - float(dropout_p)
    if rng_key is None:
        rng_key = jax.random.PRNGKey(0)
    # TODO(synk): torch's dropout RNG stream cannot be bit-matched; this gives the same
    #             Bernoulli(keep_prob) distribution with inverted-dropout scaling.
    bits = jax.random.bits(rng_key, (S, F), dtype=jnp.uint32)
    bits_spec = pl.BlockSpec((ts, bt * E), lambda i, j: (i, j))

    kernel = functools.partial(_pe_add_dropout_kernel,
                               batch_tile=bt, embed_dim=E, keep_prob=keep_prob)
    cost = pl.CostEstimate(flops=3 * S * F, transcendentals=0,
                           bytes_accessed=bytes_io + S * F * 4)
    y2 = pl.pallas_call(
        kernel,
        out_shape=out_shape,
        grid_spec=pltpu.PrefetchScalarGridSpec(
            num_scalar_prefetch=0, grid=grid,
            in_specs=[x_spec, pe_spec, bits_spec], out_specs=out_spec),
        compiler_params=cparams,
        cost_estimate=cost,
    )(x2, pe2, bits)
    return y2.reshape(S, B, E)


# ---------------------------------------------------------------------------
# Demo / self-check
# ---------------------------------------------------------------------------
if __name__ == "__main__":
    embed_dim = 32
    max_seq_len = 200
    batch = 2

    pe = make_positional_encoding(max_seq_len, embed_dim)

    # --- eval-mode forward (dropout identity), seq multiple of the sublane tile ---
    seq_len = 8
    x = jax.random.normal(jax.random.PRNGKey(0), (seq_len, batch, embed_dim), dtype=jnp.float32)
    y = jax.block_until_ready(positional_encoder(x, pe, dropout_p=0.1, training=False))
    ref = x + pe[:seq_len]
    assert y.shape == (seq_len, batch, embed_dim)
    assert jnp.allclose(y, ref, atol=1e-6, rtol=1e-6)

    # --- eval-mode forward, seq NOT a multiple of 8 (exercises masked tail rows) ---
    seq_len2 = 12
    xb = jax.random.normal(jax.random.PRNGKey(1), (seq_len2, batch, embed_dim), dtype=jnp.float32)
    yb = jax.block_until_ready(positional_encoder(xb, pe, dropout_p=0.1, training=False))
    assert yb.shape == (seq_len2, batch, embed_dim)
    assert jnp.allclose(yb, xb + pe[:seq_len2], atol=1e-6, rtol=1e-6)

    # --- bf16 eval-mode forward (exercises pe dtype cast + 16-row sublane tile) ---
    xh = xb.astype(jnp.bfloat16)
    yh = jax.block_until_ready(positional_encoder(xh, pe, dropout_p=0.1, training=False))
    assert yh.dtype == jnp.bfloat16 and yh.shape == (seq_len2, batch, embed_dim)
    assert jnp.allclose(yh.astype(jnp.float32),
                        (xh + pe[:seq_len2].astype(jnp.bfloat16)).astype(jnp.float32),
                        atol=1e-2, rtol=1e-2)

    # --- training-mode forward (inverted dropout from a precomputed bits stream) ---
    p = 0.1
    y_tr = jax.block_until_ready(
        positional_encoder(x, pe, dropout_p=p, training=True,
                           rng_key=jax.random.PRNGKey(1234))
    )
    assert y_tr.shape == (seq_len, batch, embed_dim)
    # Invariant: every non-zero output equals (x + pe) / keep_prob.
    keep = 1.0 - p
    kept = y_tr != 0
    scaled_ref = ref / keep
    assert jnp.allclose(jnp.where(kept, y_tr, scaled_ref), scaled_ref, atol=1e-5, rtol=1e-5)

    print("KERNEL_OK")
</pallas_src>

<mosaic_0001>
module attributes {stable_mosaic.version = 11 : i64} {
  func.func @_pe_add_kernel(%arg0: i32, %arg1: i32, %arg2: memref<8x64xf32, #tpu.memory_space<vmem>>, %arg3: memref<8x32xf32, #tpu.memory_space<vmem>>, %arg4: memref<8x64xf32, #tpu.memory_space<vmem>>) attributes {dimension_semantics = [#tpu.dimension_semantics<parallel>, #tpu.dimension_semantics<parallel>], iteration_bounds = array<i64: 1, 1>, scalar_prefetch = 0 : i64, scratch_operands = 0 : i64, tpu.core_type = #tpu.core_type<tc>, window_params = [{transform_indices = @transform_0, window_bounds = array<i64: 8, 64>}, {transform_indices = @transform_1, window_bounds = array<i64: 8, 32>}, {transform_indices = @transform_2, window_bounds = array<i64: 8, 64>}]} {
    %c0 = arith.constant 0 : index
    %c0_0 = arith.constant 0 : index
    %0 = vector.load %arg3[%c0, %c0_0] : memref<8x32xf32, #tpu.memory_space<vmem>>, vector<8x32xf32>
    %c0_1 = arith.constant 0 : index
    %c0_2 = arith.constant 0 : index
    %1 = vector.load %arg2[%c0_1, %c0_2] : memref<8x64xf32, #tpu.memory_space<vmem>>, vector<8x32xf32>
    %2 = arith.addf %1, %0 : vector<8x32xf32>
    %c0_3 = arith.constant 0 : index
    %c0_4 = arith.constant 0 : index
    %3 = vector.load %arg4[%c0_3, %c0_4] : memref<8x64xf32, #tpu.memory_space<vmem>>, vector<8x32xf32>
    tpu.vector_store %arg4[%c0_3, %c0_4], %2 {strides = array<i32>} : memref<8x64xf32, #tpu.memory_space<vmem>>, vector<8x32xf32>,
    %c0_5 = arith.constant 0 : index
    %c32 = arith.constant 32 : index
    %4 = vector.load %arg2[%c0_5, %c32] : memref<8x64xf32, #tpu.memory_space<vmem>>, vector<8x32xf32>
    %5 = arith.addf %4, %0 : vector<8x32xf32>
    %c0_6 = arith.constant 0 : index
    %c32_7 = arith.constant 32 : index
    %6 = vector.load %arg4[%c0_6, %c32_7] : memref<8x64xf32, #tpu.memory_space<vmem>>, vector<8x32xf32>
    tpu.vector_store %arg4[%c0_6, %c32_7], %5 {strides = array<i32>} : memref<8x64xf32, #tpu.memory_space<vmem>>, vector<8x32xf32>,
    return
  }
  func.func @transform_0(%arg0: i32, %arg1: i32) -> (i32, i32) {
    %c0_i32 = arith.constant 0 : i32
    return %arg0, %arg1 : i32, i32
  }
  func.func @transform_1(%arg0: i32, %arg1: i32) -> (i32, i32) {
    %c0_i32 = arith.constant 0 : i32
    %c0_i32_0 = arith.constant 0 : i32
    return %arg0, %c0_i32 : i32, i32
  }
  func.func @transform_2(%arg0: i32, %arg1: i32) -> (i32, i32) {
    %c0_i32 = arith.constant 0 : i32
    return %arg0, %arg1 : i32, i32
  }
}

</mosaic_0001>

<llo_original>
// kernel: tpu_custom_call.1
$region0: #{tpu_custom_call.1}
  #allocation0 [shape = 'u32[]', space=smem, size = 0x4, offset = 0x4, fixed_abs, tag = 'smem constant byte address 0x4 - core index']
  #allocation1 [shape = 'u32[72,128]{1,0:T(1,128)}', space=vmem, size = 0x9000, scoped, tag = 'internal scratch']
  %s0 = inlined_call_operand.vmem [shape: f32[8,64], index: 0, kind: input, shape index: {}]
  %s1 = inlined_call_operand.vmem [shape: f32[200,32], index: 1, kind: input, shape index: {}]
  %s2 = inlined_call_operand.hbm [shape: f32[8,64], index: 2, kind: output, shape index: {}]
  %s3 = sld [smem:[#allocation0]]
  $region18: #{tpu_custom_call.1} parent=0
    _
  %s5 = ssub.s32 1, %s3
  %s6 = scalar_select 0, %s5, %s3
  $region1: #{tpu_custom_call.1} parent=0
    #allocation2 [shape = 'u8[4096]{0}', space=vmem, size = 0x1000, scoped, tag = 'output window, operand 0, single buffered']
    #allocation3 [shape = 's32[1]{0}', space=sflag, size = 0x4, scoped, tag = 'scoped memory for tpu_custom_call.1']
    %7 = vsyncpa [#allocation3], 0
    // Predicated region
    $region2: #{tpu_custom_call.1} parent=1 // pred_check
      _
    $region3: #{tpu_custom_call.1} parent=1 // pred_check_branch
      %9 = sbr.rel (0) target = $region5
    $region4: #{tpu_custom_call.1} parent=1 // pred_region
      _
    $region5: #{tpu_custom_call.1} parent=1 // pred_fallthru
      _
    // Predicated region
    $region6: #{tpu_custom_call.1} parent=1 // pred_check
      _
    $region7: #{tpu_custom_call.1} parent=1 // pred_check_branch
      %11 = sbr.rel (0) target = $region9
    $region8: #{tpu_custom_call.1} parent=1 // pred_region
      _
    $region9: #{tpu_custom_call.1} parent=1 // pred_fallthru
      _
    %v12 = vld [vmem:[%s1] sm:$0xff]
    %v13 = vld [vmem:[%s0] sm:$0xff]
    %v14 = vadd.f32 %v13, %v12
    %vm15 = vcmask 261120
    %16 = vst.msk [vmem:[#allocation2] sm:$0xff] %vm15, %v14
    %v17 = vld [vmem:[%s0] sm:$0xff]
    %19 = vrot.lane.b32.xlu0 %v12, 32
    %v20 = vpop.permute.xlu0 %19
    %v22 = vadd.f32 %v17, %v20
    %vm23 = vcmask 523520
    %24 = vst.msk [vmem:[#allocation2] sm:$0xff] %vm23, %v22
    // Predicated region
    $region10: #{tpu_custom_call.1} parent=1 // pred_check
      _
    $region11: #{tpu_custom_call.1} parent=1 // pred_check_branch
      %26 = sbr.rel (0) target = $region13
    $region12: #{tpu_custom_call.1} parent=1 // pred_region
      %28 = vsyncadd [#allocation3], 0
      %s30 = sshll.u32 [#allocation2], 4
      %s31 = int_to_ptr.vmem [resolvable:$true] %s30
      %s32 = sshll.u32 %s2, 4
      %s33 = int_to_ptr.hbm [resolvable:$true] %s32
      %35 = dma.vmem_to_hbm [thread:$0]  %s31, 128, %s33, [#allocation3]
    $region13: #{tpu_custom_call.1} parent=1 // pred_fallthru
      _
    // Predicated region
    $region14: #{tpu_custom_call.1} parent=1 // pred_check
      _
    $region15: #{tpu_custom_call.1} parent=1 // pred_check_branch
      %37 = sbr.rel (0) target = $region17
    $region16: #{tpu_custom_call.1} parent=1 // pred_region
      %39 = dma.done [#allocation3], 128
    $region17: #{tpu_custom_call.1} parent=1 // pred_fallthru
      _
    %40 = vsyncpa [#allocation3], 1

</llo_original>
